<compile_context>
chip_gen: v5e
topology: v5e:2x2
jax: 0.10.0
libtpu: 0.0.40
codegen_flags: <defaults>
</compile_context>

<pallas_src>
import jax
import jax.numpy as jnp
from jax.experimental import pallas as pl
from jax.experimental.pallas import tpu as pltpu

# ---- "config" (consistent with the module) ---------------------------------
N_IN = 64          # config.model.MLP.n_in (= C*S after flatten: 4*16)
N_HIDDEN = 32      # config.model.MLP.n_hidden
N_LAYERS = 2       # config.model.MLP.n_layers
N_CLASSES = 5      # config.dataloader.AmazonReviews.n_classes
N_ADAPT = N_HIDDEN // 2
# config.model.MLP.activation -> ReLU; dropout -> identity in eval mode.
# TODO(synk): training-mode Dropout (stochastic masking) not implemented; eval semantics only.

LANE = 128
H_P = ((N_HIDDEN + LANE - 1) // LANE) * LANE     # 128
A_P = ((N_ADAPT + LANE - 1) // LANE) * LANE      # 128
OUT_P = LANE                                     # fused heads: 2*N_CLASSES -> 128 lanes

MAX_TB = 2048                                    # batch-tile cap (per perf review)


def _round_up(n, m):
    return ((n + m - 1) // m) * m


def mlp_kernel(x_ref,
               w_in_ref, b_in_ref,
               w_hid_ref, b_hid_ref,
               w_ad_ref, b_ad_ref,
               w_head_ref, b_head_ref,
               o_ref):
    # In-kernel f32 -> bf16 cast of the activation tile (VPU has >50x slack here),
    # then bf16 MXU matmul with f32 accumulation; bias + ReLU on the f32
    # accumulator, downcast to bf16 only for the next MXU pass.
    x = x_ref[...].astype(jnp.bfloat16)
    h = jnp.dot(x, w_in_ref[...], preferred_element_type=jnp.float32)
    h = jnp.maximum(h + b_in_ref[...], 0.0).astype(jnp.bfloat16)

    # Hidden stack (static unroll: N_LAYERS is a compile-time constant).
    for i in range(N_LAYERS):
        h = jnp.dot(h, w_hid_ref[i], preferred_element_type=jnp.float32)
        h = jnp.maximum(h + b_hid_ref[i], 0.0).astype(jnp.bfloat16)
        # Dropout(p) -> identity at inference.

    # Adaptation layer.
    h = jnp.dot(h, w_ad_ref[...], preferred_element_type=jnp.float32)
    h = jnp.maximum(h + b_ad_ref[...], 0.0).astype(jnp.bfloat16)

    # Fused heads ([out_class | aux_class]); single lane-dense (TB, 128) bf16 store.
    o_ref[...] = (jnp.dot(h, w_head_ref[...], preferred_element_type=jnp.float32)
                  + b_head_ref[...]).astype(o_ref.dtype)


def init_params(key):
    """PyTorch-style Linear init: U(-1/sqrt(fan_in), ...). Weights stored as (in, out)."""
    def linear(k, fan_in, fan_out):
        kw, kb = jax.random.split(k)
        bound = 1.0 / jnp.sqrt(float(fan_in))
        w = jax.random.uniform(kw, (fan_in, fan_out), jnp.float32, -bound, bound)
        b = jax.random.uniform(kb, (1, fan_out), jnp.float32, -bound, bound)
        return w, b

    keys = jax.random.split(key, 5 + N_LAYERS)
    w_in, b_in = linear(keys[0], N_IN, N_HIDDEN)

    w_hs, b_hs = [], []
    for i in range(N_LAYERS):
        w, b = linear(keys[1 + i], N_HIDDEN, N_HIDDEN)
        w_hs.append(w)
        b_hs.append(b)
    w_hid = jnp.stack(w_hs, axis=0)                      # (L, H, H)
    b_hid = jnp.stack(b_hs, axis=0)                      # (L, 1, H)

    w_ad, b_ad = linear(keys[1 + N_LAYERS], N_HIDDEN, N_ADAPT)
    w_out, b_out = linear(keys[2 + N_LAYERS], N_ADAPT, N_CLASSES)
    w_aux, b_aux = linear(keys[3 + N_LAYERS], N_ADAPT, N_CLASSES)

    return dict(w_in=w_in, b_in=b_in, w_hid=w_hid, b_hid=b_hid,
                w_ad=w_ad, b_ad=b_ad, w_out=w_out, b_out=b_out,
                w_aux=w_aux, b_aux=b_aux)


def pack_params(params):
    """Lane-pad feature dims to 128 (except w_in's input dim, which stays 64),
    cast weights to bf16, keep biases f32, fuse the two heads."""
    def pad_w(w, rows, cols):
        out = jnp.zeros((rows, cols), jnp.bfloat16)
        return out.at[:w.shape[0], :w.shape[1]].set(w.astype(jnp.bfloat16))

    def pad_b(b, cols):
        out = jnp.zeros((1, cols), jnp.float32)
        return out.at[:, :b.shape[1]].set(b.astype(jnp.float32))

    w_hid = jnp.stack([pad_w(params["w_hid"][i], H_P, H_P) for i in range(N_LAYERS)])
    b_hid = jnp.stack([pad_b(params["b_hid"][i], H_P) for i in range(N_LAYERS)])

    w_head = jnp.concatenate([params["w_out"], params["w_aux"]], axis=1)   # (A, 2C)
    b_head = jnp.concatenate([params["b_out"], params["b_aux"]], axis=1)   # (1, 2C)

    return dict(
        w_in=pad_w(params["w_in"], N_IN, H_P),            # (64, 128): no row padding
        b_in=pad_b(params["b_in"], H_P),
        w_hid=w_hid, b_hid=b_hid,
        w_ad=pad_w(params["w_ad"], H_P, A_P), b_ad=pad_b(params["b_ad"], A_P),
        w_head=pad_w(w_head, A_P, OUT_P), b_head=pad_b(b_head, OUT_P),
    )


def _choose_tiling(B):
    """Pick (TB, n_tiles, B_pad): tiles up to MAX_TB rows, >=2 grid steps when the
    batch allows it (two v7x TensorCores), and minimal batch padding."""
    B8 = max(8, _round_up(B, 8))
    n_tiles = pl.cdiv(B8, MAX_TB)
    if B8 >= 16:
        n_tiles = max(n_tiles, 2)          # keep both TCs busy on v7x
    TB = _round_up(pl.cdiv(B8, n_tiles), 8)
    B_pad = n_tiles * TB
    return TB, n_tiles, B_pad


def mlp_forward(x, packed):
    """x: [B, C, S] float32. Returns (c, a) each [B, N_CLASSES] float32."""
    B = x.shape[0]
    h = x.reshape(B, -1).astype(jnp.float32)              # nn.Flatten (glue), stays f32
    assert h.shape[1] == N_IN

    TB, n_tiles, B_pad = _choose_tiling(B)
    grid = (n_tiles,)

    # Only a cheap row-pad (same dtype, same width), and only if B isn't tile-aligned.
    if B_pad != B:
        h = jnp.pad(h, ((0, B_pad - B), (0, 0)))

    def full_spec(a):  # grid-invariant, fully VMEM-resident weight/bias
        nd = a.ndim
        return pl.BlockSpec(a.shape, lambda i, nd=nd: (0,) * nd)

    weights = (packed["w_in"], packed["b_in"], packed["w_hid"], packed["b_hid"],
               packed["w_ad"], packed["b_ad"], packed["w_head"], packed["b_head"])

    out = pl.pallas_call(
        mlp_kernel,
        out_shape=jax.ShapeDtypeStruct((B_pad, OUT_P), jnp.bfloat16),
        grid=grid,
        # Input block last dim (64) == full array dim -> legal; no 128-lane padding of x.
        in_specs=[pl.BlockSpec((TB, N_IN), lambda i: (i, 0))]
                 + [full_spec(w) for w in weights],
        out_specs=pl.BlockSpec((TB, OUT_P), lambda i: (i, 0)),
        compiler_params=pltpu.CompilerParams(
            dimension_semantics=("parallel",)),      # shards batch across TCs on v7x
    )(h, *weights)

    c = out[:B, :N_CLASSES].astype(jnp.float32)
    a = out[:B, N_CLASSES:2 * N_CLASSES].astype(jnp.float32)
    return c, a


def reference_forward(x, params):
    """Plain-JAX reference with the same bf16 weight/activation casting."""
    B = x.shape[0]
    h = x.reshape(B, -1)

    def layer(h, w, b, act=True):
        y = jnp.dot(h.astype(jnp.bfloat16), w.astype(jnp.bfloat16),
                    preferred_element_type=jnp.float32) + b
        return jnp.maximum(y, 0.0) if act else y

    h = layer(h, params["w_in"], params["b_in"])
    for i in range(N_LAYERS):
        h = layer(h, params["w_hid"][i], params["b_hid"][i])
    h = layer(h, params["w_ad"], params["b_ad"])
    c = layer(h, params["w_out"], params["b_out"], act=False)
    a = layer(h, params["w_aux"], params["b_aux"], act=False)
    return c, a


if __name__ == "__main__":
    key = jax.random.PRNGKey(0)
    k_x, k_x2, k_p = jax.random.split(key, 3)

    params = init_params(k_p)
    packed = pack_params(params)

    # x: batch=2, channels=4, seq=16  ->  flatten -> n_in = 64
    x = jax.random.normal(k_x, (2, 4, 16), dtype=jnp.float32)
    c, a = mlp_forward(x, packed)
    jax.block_until_ready((c, a))

    assert c.shape == (2, N_CLASSES) and a.shape == (2, N_CLASSES)
    assert c.dtype == jnp.float32 and a.dtype == jnp.float32

    c_ref, a_ref = reference_forward(x, params)
    assert jnp.allclose(c, c_ref, atol=1e-2, rtol=1e-2)
    assert jnp.allclose(a, a_ref, atol=1e-2, rtol=1e-2)

    # Second shape: non-multiple-of-8 batch exercises the row-pad + 2-step grid path.
    x2 = jax.random.normal(k_x2, (10, 4, 16), dtype=jnp.float32)
    c2, a2 = mlp_forward(x2, packed)
    jax.block_until_ready((c2, a2))
    c2_ref, a2_ref = reference_forward(x2, params)
    assert c2.shape == (10, N_CLASSES) and a2.shape == (10, N_CLASSES)
    assert jnp.allclose(c2, c2_ref, atol=1e-2, rtol=1e-2)
    assert jnp.allclose(a2, a2_ref, atol=1e-2, rtol=1e-2)

    print("KERNEL_OK")
</pallas_src>

<mosaic_0001>
module attributes {stable_mosaic.version = 11 : i64} {
  func.func @mlp_kernel(%arg0: i32, %arg1: memref<8x64xf32, #tpu.memory_space<vmem>>, %arg2: memref<64x128xbf16, #tpu.memory_space<vmem>>, %arg3: memref<1x128xf32, #tpu.memory_space<vmem>>, %arg4: memref<2x128x128xbf16, #tpu.memory_space<vmem>>, %arg5: memref<2x1x128xf32, #tpu.memory_space<vmem>>, %arg6: memref<128x128xbf16, #tpu.memory_space<vmem>>, %arg7: memref<1x128xf32, #tpu.memory_space<vmem>>, %arg8: memref<128x128xbf16, #tpu.memory_space<vmem>>, %arg9: memref<1x128xf32, #tpu.memory_space<vmem>>, %arg10: memref<8x128xbf16, #tpu.memory_space<vmem>>) attributes {dimension_semantics = [#tpu.dimension_semantics<parallel>], iteration_bounds = array<i64: 1>, scalar_prefetch = 0 : i64, scratch_operands = 0 : i64, tpu.core_type = #tpu.core_type<tc>, window_params = [{transform_indices = @transform_0, window_bounds = array<i64: 8, 64>}, {pipeline_mode = #tpu.pipeline_mode<synchronous>, transform_indices = @transform_1, window_bounds = array<i64: 64, 128>}, {pipeline_mode = #tpu.pipeline_mode<synchronous>, transform_indices = @transform_2, window_bounds = array<i64: 1, 128>}, {pipeline_mode = #tpu.pipeline_mode<synchronous>, transform_indices = @transform_3, window_bounds = array<i64: 2, 128, 128>}, {pipeline_mode = #tpu.pipeline_mode<synchronous>, transform_indices = @transform_4, window_bounds = array<i64: 2, 1, 128>}, {pipeline_mode = #tpu.pipeline_mode<synchronous>, transform_indices = @transform_5, window_bounds = array<i64: 128, 128>}, {pipeline_mode = #tpu.pipeline_mode<synchronous>, transform_indices = @transform_6, window_bounds = array<i64: 1, 128>}, {pipeline_mode = #tpu.pipeline_mode<synchronous>, transform_indices = @transform_7, window_bounds = array<i64: 128, 128>}, {pipeline_mode = #tpu.pipeline_mode<synchronous>, transform_indices = @transform_8, window_bounds = array<i64: 1, 128>}, {transform_indices = @transform_9, window_bounds = array<i64: 8, 128>}]} {
    %c0 = arith.constant 0 : index
    %c0_0 = arith.constant 0 : index
    %0 = vector.load %arg1[%c0, %c0_0] : memref<8x64xf32, #tpu.memory_space<vmem>>, vector<8x64xf32>
    %1 = arith.truncf %0 : vector<8x64xf32> to vector<8x64xbf16>
    %c0_1 = arith.constant 0 : index
    %c0_2 = arith.constant 0 : index
    %2 = vector.load %arg2[%c0_1, %c0_2] : memref<64x128xbf16, #tpu.memory_space<vmem>>, vector<64x128xbf16>
    %cst = arith.constant dense<0.000000e+00> : vector<8x128xf32>
    %3 = tpu.matmul %1, %2, %cst {dimension_numbers = #tpu.dot_dimension_numbers<[1], [0], [0], [1], [0, 0, 1, 1], [], []>} : vector<8x64xbf16>, vector<64x128xbf16>, vector<8x128xf32> -> vector<8x128xf32>
    %c0_3 = arith.constant 0 : index
    %c0_4 = arith.constant 0 : index
    %4 = vector.load %arg3[%c0_3, %c0_4] : memref<1x128xf32, #tpu.memory_space<vmem>>, vector<1x128xf32>
    %5 = vector.broadcast %4 : vector<1x128xf32> to vector<8x128xf32>
    %6 = arith.addf %3, %5 : vector<8x128xf32>
    %cst_5 = arith.constant 0.000000e+00 : f32
    %7 = vector.broadcast %cst_5 : f32 to vector<8x128xf32>
    %8 = arith.maximumf %6, %7 : vector<8x128xf32>
    %9 = arith.truncf %8 : vector<8x128xf32> to vector<8x128xbf16>
    %c0_6 = arith.constant 0 : index
    %c0_7 = arith.constant 0 : index
    %c0_8 = arith.constant 0 : index
    %10 = vector.load %arg4[%c0_6, %c0_7, %c0_8] : memref<2x128x128xbf16, #tpu.memory_space<vmem>>, vector<1x128x128xbf16>
    %11 = vector.shape_cast %10 : vector<1x128x128xbf16> to vector<128x128xbf16>
    %cst_9 = arith.constant dense<0.000000e+00> : vector<8x128xf32>
    %12 = tpu.matmul %9, %11, %cst_9 {dimension_numbers = #tpu.dot_dimension_numbers<[1], [0], [0], [1], [0, 0, 1, 1], [], []>} : vector<8x128xbf16>, vector<128x128xbf16>, vector<8x128xf32> -> vector<8x128xf32>
    %c0_10 = arith.constant 0 : index
    %c0_11 = arith.constant 0 : index
    %c0_12 = arith.constant 0 : index
    %13 = vector.load %arg5[%c0_10, %c0_11, %c0_12] : memref<2x1x128xf32, #tpu.memory_space<vmem>>, vector<1x1x128xf32>
    %14 = vector.shape_cast %13 : vector<1x1x128xf32> to vector<1x128xf32>
    %15 = vector.broadcast %14 : vector<1x128xf32> to vector<8x128xf32>
    %16 = arith.addf %12, %15 : vector<8x128xf32>
    %cst_13 = arith.constant 0.000000e+00 : f32
    %17 = vector.broadcast %cst_13 : f32 to vector<8x128xf32>
    %18 = arith.maximumf %16, %17 : vector<8x128xf32>
    %19 = arith.truncf %18 : vector<8x128xf32> to vector<8x128xbf16>
    %c1 = arith.constant 1 : index
    %c0_14 = arith.constant 0 : index
    %c0_15 = arith.constant 0 : index
    %20 = vector.load %arg4[%c1, %c0_14, %c0_15] : memref<2x128x128xbf16, #tpu.memory_space<vmem>>, vector<1x128x128xbf16>
    %21 = vector.shape_cast %20 : vector<1x128x128xbf16> to vector<128x128xbf16>
    %cst_16 = arith.constant dense<0.000000e+00> : vector<8x128xf32>
    %22 = tpu.matmul %19, %21, %cst_16 {dimension_numbers = #tpu.dot_dimension_numbers<[1], [0], [0], [1], [0, 0, 1, 1], [], []>} : vector<8x128xbf16>, vector<128x128xbf16>, vector<8x128xf32> -> vector<8x128xf32>
    %c1_17 = arith.constant 1 : index
    %c0_18 = arith.constant 0 : index
    %c0_19 = arith.constant 0 : index
    %23 = vector.load %arg5[%c1_17, %c0_18, %c0_19] : memref<2x1x128xf32, #tpu.memory_space<vmem>>, vector<1x1x128xf32>
    %24 = vector.shape_cast %23 : vector<1x1x128xf32> to vector<1x128xf32>
    %25 = vector.broadcast %24 : vector<1x128xf32> to vector<8x128xf32>
    %26 = arith.addf %22, %25 : vector<8x128xf32>
    %cst_20 = arith.constant 0.000000e+00 : f32
    %27 = vector.broadcast %cst_20 : f32 to vector<8x128xf32>
    %28 = arith.maximumf %26, %27 : vector<8x128xf32>
    %29 = arith.truncf %28 : vector<8x128xf32> to vector<8x128xbf16>
    %c0_21 = arith.constant 0 : index
    %c0_22 = arith.constant 0 : index
    %30 = vector.load %arg6[%c0_21, %c0_22] : memref<128x128xbf16, #tpu.memory_space<vmem>>, vector<128x128xbf16>
    %cst_23 = arith.constant dense<0.000000e+00> : vector<8x128xf32>
    %31 = tpu.matmul %29, %30, %cst_23 {dimension_numbers = #tpu.dot_dimension_numbers<[1], [0], [0], [1], [0, 0, 1, 1], [], []>} : vector<8x128xbf16>, vector<128x128xbf16>, vector<8x128xf32> -> vector<8x128xf32>
    %c0_24 = arith.constant 0 : index
    %c0_25 = arith.constant 0 : index
    %32 = vector.load %arg7[%c0_24, %c0_25] : memref<1x128xf32, #tpu.memory_space<vmem>>, vector<1x128xf32>
    %33 = vector.broadcast %32 : vector<1x128xf32> to vector<8x128xf32>
    %34 = arith.addf %31, %33 : vector<8x128xf32>
    %cst_26 = arith.constant 0.000000e+00 : f32
    %35 = vector.broadcast %cst_26 : f32 to vector<8x128xf32>
    %36 = arith.maximumf %34, %35 : vector<8x128xf32>
    %37 = arith.truncf %36 : vector<8x128xf32> to vector<8x128xbf16>
    %c0_27 = arith.constant 0 : index
    %c0_28 = arith.constant 0 : index
    %38 = vector.load %arg8[%c0_27, %c0_28] : memref<128x128xbf16, #tpu.memory_space<vmem>>, vector<128x128xbf16>
    %cst_29 = arith.constant dense<0.000000e+00> : vector<8x128xf32>
    %39 = tpu.matmul %37, %38, %cst_29 {dimension_numbers = #tpu.dot_dimension_numbers<[1], [0], [0], [1], [0, 0, 1, 1], [], []>} : vector<8x128xbf16>, vector<128x128xbf16>, vector<8x128xf32> -> vector<8x128xf32>
    %c0_30 = arith.constant 0 : index
    %c0_31 = arith.constant 0 : index
    %40 = vector.load %arg9[%c0_30, %c0_31] : memref<1x128xf32, #tpu.memory_space<vmem>>, vector<1x128xf32>
    %41 = vector.broadcast %40 : vector<1x128xf32> to vector<8x128xf32>
    %42 = arith.addf %39, %41 : vector<8x128xf32>
    %43 = arith.truncf %42 : vector<8x128xf32> to vector<8x128xbf16>
    %c0_32 = arith.constant 0 : index
    %c0_33 = arith.constant 0 : index
    %44 = vector.load %arg10[%c0_32, %c0_33] : memref<8x128xbf16, #tpu.memory_space<vmem>>, vector<8x128xbf16>
    tpu.vector_store %arg10[%c0_32, %c0_33], %43 {strides = array<i32>} : memref<8x128xbf16, #tpu.memory_space<vmem>>, vector<8x128xbf16>,
    return
  }
  func.func @transform_0(%arg0: i32) -> (i32, i32) {
    %c0_i32 = arith.constant 0 : i32
    %c0_i32_0 = arith.constant 0 : i32
    return %arg0, %c0_i32 : i32, i32
  }
  func.func @transform_1(%arg0: i32) -> (i32, i32) {
    %c0_i32 = arith.constant 0 : i32
    %c0_i32_0 = arith.constant 0 : i32
    %c0_i32_1 = arith.constant 0 : i32
    return %c0_i32, %c0_i32_0 : i32, i32
  }
  func.func @transform_2(%arg0: i32) -> (i32, i32) {
    %c0_i32 = arith.constant 0 : i32
    %c0_i32_0 = arith.constant 0 : i32
    %c0_i32_1 = arith.constant 0 : i32
    return %c0_i32, %c0_i32_0 : i32, i32
  }
  func.func @transform_3(%arg0: i32) -> (i32, i32, i32) {
    %c0_i32 = arith.constant 0 : i32
    %c0_i32_0 = arith.constant 0 : i32
    %c0_i32_1 = arith.constant 0 : i32
    %c0_i32_2 = arith.constant 0 : i32
    return %c0_i32, %c0_i32_0, %c0_i32_1 : i32, i32, i32
  }
  func.func @transform_4(%arg0: i32) -> (i32, i32, i32) {
    %c0_i32 = arith.constant 0 : i32
    %c0_i32_0 = arith.constant 0 : i32
    %c0_i32_1 = arith.constant 0 : i32
    %c0_i32_2 = arith.constant 0 : i32
    return %c0_i32, %c0_i32_0, %c0_i32_1 : i32, i32, i32
  }
  func.func @transform_5(%arg0: i32) -> (i32, i32) {
    %c0_i32 = arith.constant 0 : i32
    %c0_i32_0 = arith.constant 0 : i32
    %c0_i32_1 = arith.constant 0 : i32
    return %c0_i32, %c0_i32_0 : i32, i32
  }
  func.func @transform_6(%arg0: i32) -> (i32, i32) {
    %c0_i32 = arith.constant 0 : i32
    %c0_i32_0 = arith.constant 0 : i32
    %c0_i32_1 = arith.constant 0 : i32
    return %c0_i32, %c0_i32_0 : i32, i32
  }
  func.func @transform_7(%arg0: i32) -> (i32, i32) {
    %c0_i32 = arith.constant 0 : i32
    %c0_i32_0 = arith.constant 0 : i32
    %c0_i32_1 = arith.constant 0 : i32
    return %c0_i32, %c0_i32_0 : i32, i32
  }
  func.func @transform_8(%arg0: i32) -> (i32, i32) {
    %c0_i32 = arith.constant 0 : i32
    %c0_i32_0 = arith.constant 0 : i32
    %c0_i32_1 = arith.constant 0 : i32
    return %c0_i32, %c0_i32_0 : i32, i32
  }
  func.func @transform_9(%arg0: i32) -> (i32, i32) {
    %c0_i32 = arith.constant 0 : i32
    %c0_i32_0 = arith.constant 0 : i32
    return %arg0, %c0_i32 : i32, i32
  }
}

</mosaic_0001>

<llo_original>
// kernel: tpu_custom_call.1
$region0: #{tpu_custom_call.1}
  #allocation0 [shape = 'u32[]', space=smem, size = 0x4, offset = 0x4, fixed_abs, tag = 'smem constant byte address 0x4 - core index']
  #allocation1 [shape = 'u32[72,128]{1,0:T(1,128)}', space=vmem, size = 0x9000, scoped, tag = 'internal scratch']
  %s0 = inlined_call_operand.hbm [shape: f32[8,64], index: 0, kind: input, shape index: {}]
  %s1 = inlined_call_operand.hbm [shape: bf16[64,128], index: 1, kind: input, shape index: {}]
  %s2 = inlined_call_operand.vmem [shape: f32[1,128], index: 2, kind: input, shape index: {}]
  %s3 = inlined_call_operand.hbm [shape: bf16[2,128,128], index: 3, kind: input, shape index: {}]
  %s4 = inlined_call_operand.vmem [shape: f32[2,1,128], index: 4, kind: input, shape index: {}]
  %s5 = inlined_call_operand.hbm [shape: bf16[128,128], index: 5, kind: input, shape index: {}]
  %s6 = inlined_call_operand.vmem [shape: f32[1,128], index: 6, kind: input, shape index: {}]
  %s7 = inlined_call_operand.hbm [shape: bf16[128,128], index: 7, kind: input, shape index: {}]
  %s8 = inlined_call_operand.vmem [shape: f32[1,128], index: 8, kind: input, shape index: {}]
  %s9 = inlined_call_operand.hbm [shape: bf16[8,128], index: 9, kind: output, shape index: {}]
  %s10 = sld [smem:[#allocation0]]
  $region66: #{tpu_custom_call.1} parent=0
    _
  %s12 = ssub.s32 1, %s10
  %s13 = scalar_select 0, %s12, %s10
  $region1: #{tpu_custom_call.1} parent=0
    #allocation2 [shape = 'u8[4096]{0}', space=vmem, size = 0x1000, scoped, tag = 'input window, operand 0, single buffered']
    #allocation3 [shape = 's32[1]{0}', space=sflag, size = 0x4, scoped, tag = 'scoped memory for tpu_custom_call.1']
    #allocation4 [shape = 's32[1]{0}', space=sflag, size = 0x4, scoped, tag = 'scoped memory for tpu_custom_call.1']
    #allocation5 [shape = 'u8[16384]{0}', space=vmem, size = 0x4000, scoped, tag = 'input window, operand 1, single buffered']
    #allocation6 [shape = 's32[1]{0}', space=sflag, size = 0x4, scoped, tag = 'scoped memory for tpu_custom_call.1']
    #allocation7 [shape = 'u8[65536]{0}', space=vmem, size = 0x10000, scoped, tag = 'input window, operand 3, single buffered']
    #allocation8 [shape = 'u8[32768]{0}', space=vmem, size = 0x8000, scoped, tag = 'input window, operand 5, single buffered']
    #allocation9 [shape = 's32[1]{0}', space=sflag, size = 0x4, scoped, tag = 'scoped memory for tpu_custom_call.1']
    #allocation10 [shape = 'u8[32768]{0}', space=vmem, size = 0x8000, scoped, tag = 'input window, operand 7, single buffered']
    #allocation11 [shape = 'u8[2048]{0}', space=vmem, size = 0x800, scoped, tag = 'output window, operand 0, single buffered']
    %14 = vsyncpa [#allocation3], 0
    %15 = vsyncpa [#allocation6], 0
    %16 = vsyncpa [#allocation9], 0
    %17 = vsyncpa [#allocation4], 0
    // Predicated region
    $region2: #{tpu_custom_call.1} parent=1 // pred_check
      _
    $region3: #{tpu_custom_call.1} parent=1 // pred_check_branch
      %19 = sbr.rel (0) target = $region5
    $region4: #{tpu_custom_call.1} parent=1 // pred_region
      %21 = vsyncadd [#allocation3], 0
      %s23 = sshll.u32 %s0, 4
      %s24 = int_to_ptr.hbm [resolvable:$true] %s23
      %s25 = sshll.u32 [#allocation2], 4
      %s26 = int_to_ptr.vmem [resolvable:$true] %s25
      %28 = dma.hbm_to_vmem [thread:$0]  %s24, 128, %s26, [#allocation3]
    $region5: #{tpu_custom_call.1} parent=1 // pred_fallthru
      _
    // Predicated region
    $region6: #{tpu_custom_call.1} parent=1 // pred_check
      _
    $region7: #{tpu_custom_call.1} parent=1 // pred_check_branch
      %30 = sbr.rel (0) target = $region9
    $region8: #{tpu_custom_call.1} parent=1 // pred_region
      %32 = vsyncadd [#allocation6], 0
      %s33 = sshll.u32 %s1, 4
      %s34 = int_to_ptr.hbm [resolvable:$true] %s33
      %s35 = sshll.u32 [#allocation5], 4
      %s36 = int_to_ptr.vmem [resolvable:$true] %s35
      %41 = dma.hbm_to_vmem [thread:$0]  %s34, 512, %s36, [#allocation6], 64, 64, 4
    $region9: #{tpu_custom_call.1} parent=1 // pred_fallthru
      _
    // Predicated region
    $region10: #{tpu_custom_call.1} parent=1 // pred_check
      _
    $region11: #{tpu_custom_call.1} parent=1 // pred_check_branch
      %43 = sbr.rel (0) target = $region13
    $region12: #{tpu_custom_call.1} parent=1 // pred_region
      _
    $region13: #{tpu_custom_call.1} parent=1 // pred_fallthru
      _
    // Predicated region
    $region14: #{tpu_custom_call.1} parent=1 // pred_check
      _
    $region15: #{tpu_custom_call.1} parent=1 // pred_check_branch
      %45 = sbr.rel (0) target = $region17
    $region16: #{tpu_custom_call.1} parent=1 // pred_region
      %47 = vsyncadd [#allocation6], 0
      %s48 = sshll.u32 %s3, 4
      %s49 = int_to_ptr.hbm [resolvable:$true] %s48
      %s50 = sshll.u32 [#allocation7], 4
      %s51 = int_to_ptr.vmem [resolvable:$true] %s50
      %56 = dma.hbm_to_vmem [thread:$0]  %s49, 2048, %s51, [#allocation6], 64, 64, 4
    $region17: #{tpu_custom_call.1} parent=1 // pred_fallthru
      _
    // Predicated region
    $region18: #{tpu_custom_call.1} parent=1 // pred_check
      _
    $region19: #{tpu_custom_call.1} parent=1 // pred_check_branch
      %58 = sbr.rel (0) target = $region21
    $region20: #{tpu_custom_call.1} parent=1 // pred_region
      _
    $region21: #{tpu_custom_call.1} parent=1 // pred_fallthru
      _
    // Predicated region
    $region22: #{tpu_custom_call.1} parent=1 // pred_check
      _
    $region23: #{tpu_custom_call.1} parent=1 // pred_check_branch
      %60 = sbr.rel (0) target = $region25
    $region24: #{tpu_custom_call.1} parent=1 // pred_region
      %62 = vsyncadd [#allocation9], 0
      %s63 = sshll.u32 %s5, 4
      %s64 = int_to_ptr.hbm [resolvable:$true] %s63
      %s65 = sshll.u32 [#allocation8], 4
      %s66 = int_to_ptr.vmem [resolvable:$true] %s65
      %71 = dma.hbm_to_vmem [thread:$0]  %s64, 1024, %s66, [#allocation9], 64, 64, 4
    $region25: #{tpu_custom_call.1} parent=1 // pred_fallthru
      _
    // Predicated region
    $region26: #{tpu_custom_call.1} parent=1 // pred_check
      _
    $region27: #{tpu_custom_call.1} parent=1 // pred_check_branch
      %73 = sbr.rel (0) target = $region29
    $region28: #{tpu_custom_call.1} parent=1 // pred_region
      _
    $region29: #{tpu_custom_call.1} parent=1 // pred_fallthru
      _
    // Predicated region
    $region30: #{tpu_custom_call.1} parent=1 // pred_check
      _
    $region31: #{tpu_custom_call.1} parent=1 // pred_check_branch
      %75 = sbr.rel (0) target = $region33
    $region32: #{tpu_custom_call.1} parent=1 // pred_region
      %77 = vsyncadd [#allocation9], 0
      %s78 = sshll.u32 %s7, 4
      %s79 = int_to_ptr.hbm [resolvable:$true] %s78
      %s80 = sshll.u32 [#allocation10], 4
      %s81 = int_to_ptr.vmem [resolvable:$true] %s80
      %86 = dma.hbm_to_vmem [thread:$0]  %s79, 1024, %s81, [#allocation9], 64, 64, 4
    $region33: #{tpu_custom_call.1} parent=1 // pred_fallthru
      _
    // Predicated region
    $region34: #{tpu_custom_call.1} parent=1 // pred_check
      _
    $region35: #{tpu_custom_call.1} parent=1 // pred_check_branch
      %88 = sbr.rel (0) target = $region37
    $region36: #{tpu_custom_call.1} parent=1 // pred_region
      _
    $region37: #{tpu_custom_call.1} parent=1 // pred_fallthru
      _
    // Predicated region
    $region38: #{tpu_custom_call.1} parent=1 // pred_check
      _
    $region39: #{tpu_custom_call.1} parent=1 // pred_check_branch
      %90 = sbr.rel (0) target = $region41
    $region40: #{tpu_custom_call.1} parent=1 // pred_region
      %92 = dma.done [#allocation3], 128
    $region41: #{tpu_custom_call.1} parent=1 // pred_fallthru
      _
    // Predicated region
    $region42: #{tpu_custom_call.1} parent=1 // pred_check
      _
    $region43: #{tpu_custom_call.1} parent=1 // pred_check_branch
      %94 = sbr.rel (0) target = $region45
    $region44: #{tpu_custom_call.1} parent=1 // pred_region
      %96 = dma.done [#allocation6], 512
    $region45: #{tpu_custom_call.1} parent=1 // pred_fallthru
      _
    // Predicated region
    $region46: #{tpu_custom_call.1} parent=1 // pred_check
      _
    $region47: #{tpu_custom_call.1} parent=1 // pred_check_branch
      %98 = sbr.rel (0) target = $region49
    $region48: #{tpu_custom_call.1} parent=1 // pred_region
      %100 = dma.done [#allocation6], 2048
    $region49: #{tpu_custom_call.1} parent=1 // pred_fallthru
      _
    // Predicated region
    $region50: #{tpu_custom_call.1} parent=1 // pred_check
      _
    $region51: #{tpu_custom_call.1} parent=1 // pred_check_branch
      %102 = sbr.rel (0) target = $region53
    $region52: #{tpu_custom_call.1} parent=1 // pred_region
      %104 = dma.done [#allocation9], 1024
    $region53: #{tpu_custom_call.1} parent=1 // pred_fallthru
      _
    // Predicated region
    $region54: #{tpu_custom_call.1} parent=1 // pred_check
      _
    $region55: #{tpu_custom_call.1} parent=1 // pred_check_branch
      %106 = sbr.rel (0) target = $region57
    $region56: #{tpu_custom_call.1} parent=1 // pred_region
      %108 = dma.done [#allocation9], 1024
    $region57: #{tpu_custom_call.1} parent=1 // pred_fallthru
      _
    %v110 = vld [vmem:[#allocation2] sm:$0xff]
    %v111 = vpack.c.bf16 %v110, %v110
    %v112 = vld [vmem:[#allocation5] sm:$0xf]
    %v113 = vld [vmem:[#allocation5 + $0x4] sm:$0xf]
    %v114 = vld [vmem:[#allocation5 + $0x8] sm:$0xf]
    %v115 = vld [vmem:[#allocation5 + $0xc] sm:$0xf]
    %v116 = vld [vmem:[#allocation5 + $0x10] sm:$0xf]
    %v117 = vld [vmem:[#allocation5 + $0x14] sm:$0xf]
    %v118 = vld [vmem:[#allocation5 + $0x18] sm:$0xf]
    %v119 = vld [vmem:[#allocation5 + $0x1c] sm:$0xf]
    %v120 = vld [vmem:[%s2] sm:$0x1]
    %v122 = vperm.slane %v120, 0
    %v132 = vunpack.c.l.b16 %v112
    %v133 = vunpack.c.l.b16 %v113
    %v134 = vunpack.c.l.b16 %v114
    %v135 = vunpack.c.l.b16 %v115
    %v136 = vunpack.c.l.b16 %v116
    %v137 = vunpack.c.l.b16 %v117
    %v138 = vunpack.c.l.b16 %v118
    %v139 = vunpack.c.l.b16 %v119
    %v140 = vpack.c.b16 %v133, %v132
    %v141 = vpack.c.b16 %v135, %v134
    %v142 = vpack.c.b16 %v137, %v136
    %v143 = vpack.c.b16 %v139, %v138
    %vm148 = vcmask 523264
    %v150 = vsel %vm148, %v111, 0
    %152 = vmatpush.bf16.msra.mxu0 0
    %153 = vmatpush.bf16.msra.mxu0 0
    %154 = vmatpush.bf16.msra.mxu0 0
    %155 = vmatpush.bf16.msra.mxu0 0
    %156 = vmatpush.bf16.msra.mxu0 %v143
    %157 = vmatpush.bf16.msra.mxu0 %v142
    %158 = vmatpush.bf16.msra.mxu0 %v141
    %159 = vmatpush.bf16.msra.mxu0 %v140
    %160 = vmatmul.bf16.gmra.mxu0 %v150
    %v161 = vpop.f32.mrf.mxu0
    %v162 = vadd.f32 %v122, %v161
    %v163 = vpop.f32.mrf.mxu0
    %164 = vdwg.mxu0
    %v165 = vmax.f32 %v162, 0.0
    %v166 = vpack.c.bf16 %v165, %v165
    %v167 = vld [vmem:[#allocation7] sm:$0xf]
    %v168 = vld [vmem:[#allocation7 + $0x4] sm:$0xf]
    %v169 = vld [vmem:[#allocation7 + $0x8] sm:$0xf]
    %v170 = vld [vmem:[#allocation7 + $0xc] sm:$0xf]
    %v171 = vld [vmem:[#allocation7 + $0x10] sm:$0xf]
    %v172 = vld [vmem:[#allocation7 + $0x14] sm:$0xf]
    %v173 = vld [vmem:[#allocation7 + $0x18] sm:$0xf]
    %v174 = vld [vmem:[#allocation7 + $0x1c] sm:$0xf]
    %v175 = vld [vmem:[#allocation7 + $0x20] sm:$0xf]
    %v176 = vld [vmem:[#allocation7 + $0x24] sm:$0xf]
    %v177 = vld [vmem:[#allocation7 + $0x28] sm:$0xf]
    %v178 = vld [vmem:[#allocation7 + $0x2c] sm:$0xf]
    %v179 = vld [vmem:[#allocation7 + $0x30] sm:$0xf]
    %v180 = vld [vmem:[#allocation7 + $0x34] sm:$0xf]
    %v181 = vld [vmem:[#allocation7 + $0x38] sm:$0xf]
    %v182 = vld [vmem:[#allocation7 + $0x3c] sm:$0xf]
    %v183 = vld [vmem:[%s4] sm:$0x1]
    %v185 = vperm.slane %v183, 0
    %v203 = vunpack.c.l.b16 %v167
    %v204 = vunpack.c.l.b16 %v168
    %v205 = vunpack.c.l.b16 %v169
    %v206 = vunpack.c.l.b16 %v170
    %v207 = vunpack.c.l.b16 %v171
    %v208 = vunpack.c.l.b16 %v172
    %v209 = vunpack.c.l.b16 %v173
    %v210 = vunpack.c.l.b16 %v174
    %v211 = vunpack.c.l.b16 %v175
    %v212 = vunpack.c.l.b16 %v176
    %v213 = vunpack.c.l.b16 %v177
    %v214 = vunpack.c.l.b16 %v178
    %v215 = vunpack.c.l.b16 %v179
    %v216 = vunpack.c.l.b16 %v180
    %v217 = vunpack.c.l.b16 %v181
    %v218 = vunpack.c.l.b16 %v182
    %v219 = vpack.c.b16 %v204, %v203
    %v220 = vpack.c.b16 %v206, %v205
    %v221 = vpack.c.b16 %v208, %v207
    %v222 = vpack.c.b16 %v210, %v209
    %v223 = vpack.c.b16 %v212, %v211
    %v224 = vpack.c.b16 %v214, %v213
    %v225 = vpack.c.b16 %v216, %v215
    %v226 = vpack.c.b16 %v218, %v217
    %235 = vmatpush.bf16.msra.mxu0 %v226
    %236 = vmatpush.bf16.msra.mxu0 %v225
    %237 = vmatpush.bf16.msra.mxu0 %v224
    %238 = vmatpush.bf16.msra.mxu0 %v223
    %239 = vmatpush.bf16.msra.mxu0 %v222
    %240 = vmatpush.bf16.msra.mxu0 %v221
    %241 = vmatpush.bf16.msra.mxu0 %v220
    %242 = vmatpush.bf16.msra.mxu0 %v219
    %243 = vmatmul.bf16.gmra.mxu0 %v166
    %v244 = vpop.f32.mrf.mxu0
    %v245 = vadd.f32 %v185, %v244
    %v246 = vpop.f32.mrf.mxu0
    %247 = vdwg.mxu0
    %v248 = vmax.f32 %v245, 0.0
    %v249 = vpack.c.bf16 %v248, %v248
    %s250 = scalar_lea.vmem [#allocation7], 64
    %v251 = vld [vmem:[%s250] sm:$0xf]
    %v252 = vld [vmem:[%s250 + $0x4] sm:$0xf]
    %v253 = vld [vmem:[%s250 + $0x8] sm:$0xf]
    %v254 = vld [vmem:[%s250 + $0xc] sm:$0xf]
    %v255 = vld [vmem:[%s250 + $0x10] sm:$0xf]
    %v256 = vld [vmem:[%s250 + $0x14] sm:$0xf]
    %v257 = vld [vmem:[%s250 + $0x18] sm:$0xf]
    %v258 = vld [vmem:[%s250 + $0x1c] sm:$0xf]
    %v259 = vld [vmem:[%s250 + $0x20] sm:$0xf]
    %v260 = vld [vmem:[%s250 + $0x24] sm:$0xf]
    %v261 = vld [vmem:[%s250 + $0x28] sm:$0xf]
    %v262 = vld [vmem:[%s250 + $0x2c] sm:$0xf]
    %v263 = vld [vmem:[%s250 + $0x30] sm:$0xf]
    %v264 = vld [vmem:[%s250 + $0x34] sm:$0xf]
    %v265 = vld [vmem:[%s250 + $0x38] sm:$0xf]
    %v266 = vld [vmem:[%s250 + $0x3c] sm:$0xf]
    %s267 = scalar_lea.vmem %s4, 1
    %v268 = vld [vmem:[%s267] sm:$0x1]
    %v270 = vperm.slane %v268, 0
    %v288 = vunpack.c.l.b16 %v251
    %v289 = vunpack.c.l.b16 %v252
    %v290 = vunpack.c.l.b16 %v253
    %v291 = vunpack.c.l.b16 %v254
    %v292 = vunpack.c.l.b16 %v255
    %v293 = vunpack.c.l.b16 %v256
    %v294 = vunpack.c.l.b16 %v257
    %v295 = vunpack.c.l.b16 %v258
    %v296 = vunpack.c.l.b16 %v259
    %v297 = vunpack.c.l.b16 %v260
    %v298 = vunpack.c.l.b16 %v261
    %v299 = vunpack.c.l.b16 %v262
    %v300 = vunpack.c.l.b16 %v263
    %v301 = vunpack.c.l.b16 %v264
    %v302 = vunpack.c.l.b16 %v265
    %v303 = vunpack.c.l.b16 %v266
    %v304 = vpack.c.b16 %v289, %v288
    %v305 = vpack.c.b16 %v291, %v290
    %v306 = vpack.c.b16 %v293, %v292
    %v307 = vpack.c.b16 %v295, %v294
    %v308 = vpack.c.b16 %v297, %v296
    %v309 = vpack.c.b16 %v299, %v298
    %v310 = vpack.c.b16 %v301, %v300
    %v311 = vpack.c.b16 %v303, %v302
    %320 = vmatpush.bf16.msra.mxu0 %v311
    %321 = vmatpush.bf16.msra.mxu0 %v310
    %322 = vmatpush.bf16.msra.mxu0 %v309
    %323 = vmatpush.bf16.msra.mxu0 %v308
    %324 = vmatpush.bf16.msra.mxu0 %v307
    %325 = vmatpush.bf16.msra.mxu0 %v306
    %326 = vmatpush.bf16.msra.mxu0 %v305
    %327 = vmatpush.bf16.msra.mxu0 %v304
    %328 = vmatmul.bf16.gmra.mxu0 %v249
    %v329 = vpop.f32.mrf.mxu0
    %v330 = vadd.f32 %v270, %v329
    %v331 = vpop.f32.mrf.mxu0
    %332 = vdwg.mxu0
    %v333 = vmax.f32 %v330, 0.0
    %v334 = vpack.c.bf16 %v333, %v333
    %v335 = vld [vmem:[#allocation8] sm:$0xf]
    %v336 = vld [vmem:[#allocation8 + $0x4] sm:$0xf]
    %v337 = vld [vmem:[#allocation8 + $0x8] sm:$0xf]
    %v338 = vld [vmem:[#allocation8 + $0xc] sm:$0xf]
    %v339 = vld [vmem:[#allocation8 + $0x10] sm:$0xf]
    %v340 = vld [vmem:[#allocation8 + $0x14] sm:$0xf]
    %v341 = vld [vmem:[#allocation8 + $0x18] sm:$0xf]
    %v342 = vld [vmem:[#allocation8 + $0x1c] sm:$0xf]
    %v343 = vld [vmem:[#allocation8 + $0x20] sm:$0xf]
    %v344 = vld [vmem:[#allocation8 + $0x24] sm:$0xf]
    %v345 = vld [vmem:[#allocation8 + $0x28] sm:$0xf]
    %v346 = vld [vmem:[#allocation8 + $0x2c] sm:$0xf]
    %v347 = vld [vmem:[#allocation8 + $0x30] sm:$0xf]
    %v348 = vld [vmem:[#allocation8 + $0x34] sm:$0xf]
    %v349 = vld [vmem:[#allocation8 + $0x38] sm:$0xf]
    %v350 = vld [vmem:[#allocation8 + $0x3c] sm:$0xf]
    %v351 = vld [vmem:[%s6] sm:$0x1]
    %v353 = vperm.slane %v351, 0
    %v371 = vunpack.c.l.b16 %v335
    %v372 = vunpack.c.l.b16 %v336
    %v373 = vunpack.c.l.b16 %v337
    %v374 = vunpack.c.l.b16 %v338
    %v375 = vunpack.c.l.b16 %v339
    %v376 = vunpack.c.l.b16 %v340
    %v377 = vunpack.c.l.b16 %v341
    %v378 = vunpack.c.l.b16 %v342
    %v379 = vunpack.c.l.b16 %v343
    %v380 = vunpack.c.l.b16 %v344
    %v381 = vunpack.c.l.b16 %v345
    %v382 = vunpack.c.l.b16 %v346
    %v383 = vunpack.c.l.b16 %v347
    %v384 = vunpack.c.l.b16 %v348
    %v385 = vunpack.c.l.b16 %v349
    %v386 = vunpack.c.l.b16 %v350
    %v387 = vpack.c.b16 %v372, %v371
    %v388 = vpack.c.b16 %v374, %v373
    %v389 = vpack.c.b16 %v376, %v375
    %v390 = vpack.c.b16 %v378, %v377
    %v391 = vpack.c.b16 %v380, %v379
    %v392 = vpack.c.b16 %v382, %v381
    %v393 = vpack.c.b16 %v384, %v383
    %v394 = vpack.c.b16 %v386, %v385
    %403 = vmatpush.bf16.msra.mxu0 %v394
    %404 = vmatpush.bf16.msra.mxu0 %v393
    %405 = vmatpush.bf16.msra.mxu0 %v392
    %406 = vmatpush.bf16.msra.mxu0 %v391
    %407 = vmatpush.bf16.msra.mxu0 %v390
    %408 = vmatpush.bf16.msra.mxu0 %v389
    %409 = vmatpush.bf16.msra.mxu0 %v388
    %410 = vmatpush.bf16.msra.mxu0 %v387
    %411 = vmatmul.bf16.gmra.mxu0 %v334
    %v412 = vpop.f32.mrf.mxu0
    %v413 = vadd.f32 %v353, %v412
    %v414 = vpop.f32.mrf.mxu0
    %415 = vdwg.mxu0
    %v416 = vmax.f32 %v413, 0.0
    %v417 = vpack.c.bf16 %v416, %v416
    %v418 = vld [vmem:[#allocation10] sm:$0xf]
    %v419 = vld [vmem:[#allocation10 + $0x4] sm:$0xf]
    %v420 = vld [vmem:[#allocation10 + $0x8] sm:$0xf]
    %v421 = vld [vmem:[#allocation10 + $0xc] sm:$0xf]
    %v422 = vld [vmem:[#allocation10 + $0x10] sm:$0xf]
    %v423 = vld [vmem:[#allocation10 + $0x14] sm:$0xf]
    %v424 = vld [vmem:[#allocation10 + $0x18] sm:$0xf]
    %v425 = vld [vmem:[#allocation10 + $0x1c] sm:$0xf]
    %v426 = vld [vmem:[#allocation10 + $0x20] sm:$0xf]
    %v427 = vld [vmem:[#allocation10 + $0x24] sm:$0xf]
    %v428 = vld [vmem:[#allocation10 + $0x28] sm:$0xf]
    %v429 = vld [vmem:[#allocation10 + $0x2c] sm:$0xf]
    %v430 = vld [vmem:[#allocation10 + $0x30] sm:$0xf]
    %v431 = vld [vmem:[#allocation10 + $0x34] sm:$0xf]
    %v432 = vld [vmem:[#allocation10 + $0x38] sm:$0xf]
    %v433 = vld [vmem:[#allocation10 + $0x3c] sm:$0xf]
    %v434 = vld [vmem:[%s8] sm:$0x1]
    %v436 = vperm.slane %v434, 0
    %v454 = vunpack.c.l.b16 %v418
    %v455 = vunpack.c.l.b16 %v419
    %v456 = vunpack.c.l.b16 %v420
    %v457 = vunpack.c.l.b16 %v421
    %v458 = vunpack.c.l.b16 %v422
    %v459 = vunpack.c.l.b16 %v423
    %v460 = vunpack.c.l.b16 %v424
    %v461 = vunpack.c.l.b16 %v425
    %v462 = vunpack.c.l.b16 %v426
    %v463 = vunpack.c.l.b16 %v427
    %v464 = vunpack.c.l.b16 %v428
    %v465 = vunpack.c.l.b16 %v429
    %v466 = vunpack.c.l.b16 %v430
    %v467 = vunpack.c.l.b16 %v431
    %v468 = vunpack.c.l.b16 %v432
    %v469 = vunpack.c.l.b16 %v433
    %v470 = vpack.c.b16 %v455, %v454
    %v471 = vpack.c.b16 %v457, %v456
    %v472 = vpack.c.b16 %v459, %v458
    %v473 = vpack.c.b16 %v461, %v460
    %v474 = vpack.c.b16 %v463, %v462
    %v475 = vpack.c.b16 %v465, %v464
    %v476 = vpack.c.b16 %v467, %v466
    %v477 = vpack.c.b16 %v469, %v468
    %486 = vmatpush.bf16.msra.mxu0 %v477
    %487 = vmatpush.bf16.msra.mxu0 %v476
    %488 = vmatpush.bf16.msra.mxu0 %v475
    %489 = vmatpush.bf16.msra.mxu0 %v474
    %490 = vmatpush.bf16.msra.mxu0 %v473
    %491 = vmatpush.bf16.msra.mxu0 %v472
    %492 = vmatpush.bf16.msra.mxu0 %v471
    %493 = vmatpush.bf16.msra.mxu0 %v470
    %494 = vmatmul.bf16.gmra.mxu0 %v417
    %v495 = vpop.f32.mrf.mxu0
    %v496 = vadd.f32 %v436, %v495
    %v497 = vpop.f32.mrf.mxu0
    %498 = vdwg.mxu0
    %v499 = vpack.c.bf16 %v496, %v496
    %500 = vst [vmem:[#allocation11] sm:$0xf] %v499
    // Predicated region
    $region58: #{tpu_custom_call.1} parent=1 // pred_check
      _
    $region59: #{tpu_custom_call.1} parent=1 // pred_check_branch
      %502 = sbr.rel (0) target = $region61
    $region60: #{tpu_custom_call.1} parent=1 // pred_region
      %504 = vsyncadd [#allocation4], 0
      %s506 = sshll.u32 [#allocation11], 4
      %s507 = int_to_ptr.vmem [resolvable:$true] %s506
      %s508 = sshll.u32 %s9, 4
      %s509 = int_to_ptr.hbm [resolvable:$true] %s508
      %511 = dma.vmem_to_hbm [thread:$0]  %s507, 64, %s509, [#allocation4]
    $region61: #{tpu_custom_call.1} parent=1 // pred_fallthru
      _
    // Predicated region
    $region62: #{tpu_custom_call.1} parent=1 // pred_check
      _
    $region63: #{tpu_custom_call.1} parent=1 // pred_check_branch
      %513 = sbr.rel (0) target = $region65
    $region64: #{tpu_custom_call.1} parent=1 // pred_region
      %515 = dma.done [#allocation4], 64
    $region65: #{tpu_custom_call.1} parent=1 // pred_fallthru
      _
    %516 = vsyncpa [#allocation3], 1
    %517 = vsyncpa [#allocation6], 1
    %518 = vsyncpa [#allocation9], 1
    %519 = vsyncpa [#allocation4], 1

</llo_original>
